<compile_context>
chip_gen: v7x
topology: tpu7x:2x2x1
jax: 0.10.0
libtpu: 0.0.40
codegen_flags: <defaults>
</compile_context>

<pallas_src>
import numpy as np

import jax
import jax.numpy as jnp
from jax import lax
from jax.experimental import pallas as pl
from jax.experimental.pallas import tpu as pltpu


def _round_up(n, m):
    return ((n + m - 1) // m) * m


# ---------------------------------------------------------------------------
# Kernel 1: fused encoder (conv + transpose + flatten as lane-dense matmuls)
# ---------------------------------------------------------------------------
def _encoder_kernel(x_ref, c_ref, b_ref, o_ref):
    # x_ref: (KH, Bb*Ho, Wpad) bf16  -- pre-strided row views of padded input
    # c_ref: (KH, Wpad, col_tile) bf16 -- conv weights scattered into columns
    # b_ref: (1, col_tile) f32
    # o_ref: (Bb*Ho, col_tile) bf16  -- context tile, lane-dense last dim
    acc = jnp.zeros(o_ref.shape, jnp.float32)
    for kh in range(x_ref.shape[0]):                      # KH: tiny & static
        acc = acc + jnp.dot(x_ref[kh], c_ref[kh],
                            preferred_element_type=jnp.float32)
    o_ref[...] = (acc + b_ref[...]).astype(o_ref.dtype)


def _build_conv_columns(w_conv, b_conv, Wo, Wpad, Dpad, sw):
    """Host-side (one-time) weight-scatter operator C and bias row.

    C[kh, wo*sw + kw, f*Wo + wo] = w_conv[f, 0, kh, kw]  (padded W coords), so
    xs_kh @ C[kh] summed over kh gives the conv output already in the final
    (transpose(1,2) + flatten) context layout, zero-padded to Dpad columns.
    """
    nf, _, KH, KW = w_conv.shape
    wc = np.asarray(w_conv, np.float32)
    C = np.zeros((KH, Wpad, Dpad), np.float32)
    wo = np.arange(Wo)
    for kh in range(KH):
        for kw in range(KW):
            rows = wo * sw + kw               # always within [0, Wpad)
            for f in range(nf):
                C[kh, rows, f * Wo + wo] = wc[f, 0, kh, kw]
    bias = np.zeros((1, Dpad), np.float32)
    bias[0, :nf * Wo] = np.repeat(np.asarray(b_conv, np.float32), Wo)
    return jnp.asarray(C, jnp.bfloat16), jnp.asarray(bias, jnp.float32)


def _pick_col_tile(Dpad, KH, Wpad, budget_bytes=4 << 20):
    """Largest 128-multiple dividing Dpad whose C block stays under budget."""
    nblk = Dpad // 128
    best = 128
    for mult in range(1, nblk + 1):
        if nblk % mult == 0 and KH * Wpad * (128 * mult) * 2 <= budget_bytes:
            best = 128 * mult
    return best


def conv_encoder(x, w_conv, b_conv, stride=(2, 2), batch_block=None):
    """Encoder.forward: Conv2d(1,F,3x3,stride,pad=1) -> transpose(1,2) -> flatten.

    Returns context of shape (B, Ho, Dpad) in bf16 with Dpad = ceil(F*Wo/128)*128
    (zero-padded columns; the decoder's zero-padded W_ih rows absorb them).
    """
    B, Cin, H, W = x.shape
    assert Cin == 1, "Encoder conv expects a single input channel"
    nf, _, KH, KW = w_conv.shape
    sh, sw = stride
    ph, pw = (KH - 1) // 2, (KW - 1) // 2
    Ho = (H + 2 * ph - KH) // sh + 1
    Wo = (W + 2 * pw - KW) // sw + 1
    Wpad = W + 2 * pw
    Din = nf * Wo
    Dpad = _round_up(Din, 128)

    # Host-side layout plumbing (cheap, done once by XLA): zero-pad spatially,
    # pre-slice the KH strided row views and merge (batch, out_row) so the
    # kernel only does dense, aligned 2-D bf16 matmuls (no 0/1 selection
    # matmul, no in-kernel strided loads).
    xp = jnp.pad(x[:, 0].astype(jnp.float32), ((0, 0), (ph, ph), (pw, pw)))
    xs = jnp.stack(
        [xp[:, kh:kh + sh * (Ho - 1) + 1:sh, :] for kh in range(KH)], axis=0)
    xs = xs.reshape(KH, B * Ho, Wpad).astype(jnp.bfloat16)

    C, bias = _build_conv_columns(w_conv, b_conv, Wo, Wpad, Dpad, sw)

    Bb = B if batch_block is None else batch_block
    assert B % Bb == 0
    num_b = B // Bb
    col_tile = _pick_col_tile(Dpad, KH, Wpad)
    num_j = Dpad // col_tile

    vmem_est = 2 * (KH * Bb * Ho * Wpad * 2      # x block (bf16), double-buffered
                    + KH * Wpad * col_tile * 2   # C block (bf16)
                    + col_tile * 4               # bias
                    + Bb * Ho * col_tile * 2)    # output block (bf16)
    vmem_limit = int(min(96 << 20, max(32 << 20, 2 * vmem_est)))

    ctx2d = pl.pallas_call(
        _encoder_kernel,
        grid=(num_b, num_j),
        in_specs=[
            pl.BlockSpec((KH, Bb * Ho, Wpad), lambda b, j: (0, b, 0)),
            pl.BlockSpec((KH, Wpad, col_tile), lambda b, j: (0, 0, j)),
            pl.BlockSpec((1, col_tile), lambda b, j: (0, j)),
        ],
        out_specs=pl.BlockSpec((Bb * Ho, col_tile), lambda b, j: (b, j)),
        out_shape=jax.ShapeDtypeStruct((B * Ho, Dpad), jnp.bfloat16),
        compiler_params=pltpu.CompilerParams(
            dimension_semantics=("parallel", "parallel"),
            vmem_limit_bytes=vmem_limit),
    )(xs, C, bias)
    return ctx2d.reshape(B, Ho, Dpad)


# ---------------------------------------------------------------------------
# Kernel 2: full decoder recurrence in one invocation per batch tile
# ---------------------------------------------------------------------------
def _decoder_kernel(ctx_ref, w_hh_ref, w_ih_ref, w_out_ref, b_out_ref,
                    logits_ref, attw_ref, proj_ref):
    # ctx_ref:   (Bb, T, Dpad)   bf16
    # w_hh_ref:  (Hp, 3*Hp+128)  bf16   [Whh_r | Whh_z | Whh_n | kappa/beta]
    # w_ih_ref:  (Dpad, 3*Hp)    bf16   [Wih_r | Wih_z | Wih_n]
    # w_out_ref: (Hp, Cp) bf16   b_out_ref: (1, Cp) f32
    # logits_ref:(Bb, L, Cp) f32  attw_ref:(Bb, L, Tp) f32
    # proj_ref:  (Bb, T, 3*Hp) f32 scratch
    Bb, T, _ = ctx_ref.shape
    Hp = w_hh_ref.shape[0]
    L, Cp = logits_ref.shape[1], logits_ref.shape[2]
    Tp = attw_ref.shape[2]

    w_hh = w_hh_ref[...]
    w_out = w_out_ref[...]
    # Hoisted constant broadcast (JAX does not CSE broadcast_in_dim in a loop).
    b_out = jnp.broadcast_to(b_out_ref[...], (Bb, Cp))
    pos = lax.broadcasted_iota(jnp.float32, (1, Tp), 1)

    # --- hoisted input-side projection: one MXU pass over the context -------
    # (linear ops commute: (w @ ctx) @ W_ih == w @ (ctx @ W_ih))
    w_ih = w_ih_ref[...]
    for b in range(Bb):                                   # static, entry-only
        proj_ref[b] = jnp.dot(ctx_ref[b], w_ih,
                              preferred_element_type=jnp.float32)
    ctx_proj = proj_ref[...]                              # (Bb, T, 3*Hp) f32

    def step(i, carry):
        hidden, kappa = carry                             # (Bb, Hp), (Bb, 1) f32

        # fused hidden-side projection: GRU gates + kappa/beta block (bf16 MXU)
        gh = jnp.dot(hidden.astype(jnp.bfloat16), w_hh,
                     preferred_element_type=jnp.float32)  # (Bb, 3*Hp + 128)
        kappa_new = kappa + jnp.exp(gh[:, 3 * Hp:3 * Hp + 1])
        beta = jnp.exp(gh[:, 3 * Hp + 1:3 * Hp + 2])
        w_full = jnp.exp(-beta * (kappa_new - pos) ** 2)  # (Bb, Tp) f32

        # attention-weighted sum of the pre-projected context (tiny reduction)
        gi = jnp.einsum("bt,bth->bh", w_full[:, :T], ctx_proj,
                        preferred_element_type=jnp.float32)  # (Bb, 3*Hp)

        # GRU gate math (PyTorch r, z, n ordering), all f32 on the VPU/EUP.
        r = jax.nn.sigmoid(gi[:, :Hp] + gh[:, :Hp])
        z = jax.nn.sigmoid(gi[:, Hp:2 * Hp] + gh[:, Hp:2 * Hp])
        n = jnp.tanh(gi[:, 2 * Hp:3 * Hp] + r * gh[:, 2 * Hp:3 * Hp])
        h_new = (1.0 - z) * n + z * hidden

        # output Linear (bf16 MXU, f32 accumulate)
        logits = jnp.dot(h_new.astype(jnp.bfloat16), w_out,
                         preferred_element_type=jnp.float32) + b_out

        # VMEM-resident, lane-dense stores in the final (B, L, *) layout.
        logits_ref[:, pl.ds(i, 1), :] = logits[:, None, :]
        attw_ref[:, pl.ds(i, 1), :] = w_full[:, None, :]
        return h_new, kappa_new

    hidden0 = jnp.zeros((Bb, Hp), jnp.float32)   # get_initial_state: zeros
    kappa0 = jnp.zeros((Bb, 1), jnp.float32)     # get_initial_kappa: zeros
    lax.fori_loop(0, L, step, (hidden0, kappa0), unroll=min(L, 8))


def decoder_loop(ctx, params, output_len, batch_block=None):
    B, T, Dpad = ctx.shape
    H = params["w_hh"].shape[-1]
    Cn = params["w_out"].shape[-1]
    Hp = _round_up(H, 128)
    Cp = _round_up(Cn, 128)
    Tp = _round_up(T, 128)
    L = output_len

    if batch_block is None:
        # Grid steps are a serial loop on one TC (megacore shards "parallel"
        # axes on 2-TC parts): only split the batch when each half still gives
        # the MXU >= 8 sublane rows; otherwise keep the whole batch per tile.
        batch_block = B // 2 if (B % 2 == 0 and B // 2 >= 8) else B
    assert B % batch_block == 0
    num_b = B // batch_block
    Bb = batch_block

    f32, bf16 = jnp.float32, jnp.bfloat16

    def pad2(a, r, c):
        a = a.astype(f32)
        return jnp.pad(a, ((0, r - a.shape[0]), (0, c - a.shape[1])))

    # Lane-aligned fused weight slabs (each gate block Hp columns wide; the
    # kappa/beta projections get their own 128-wide block; padding is zeros so
    # padded hidden lanes stay exactly zero through the recurrence).
    kb = jnp.zeros((Hp, 128), f32)
    kb = kb.at[:H, 0].set(params["w_kappa"][0].astype(f32))
    kb = kb.at[:H, 1].set(params["w_beta"][0].astype(f32))
    w_hh_ext = jnp.concatenate(
        [pad2(params["w_hh"][k], Hp, Hp) for k in range(3)] + [kb],
        axis=1).astype(bf16)                               # (Hp, 3*Hp + 128)
    w_ih_all = jnp.concatenate(
        [pad2(params["w_ih"][k], Dpad, Hp) for k in range(3)],
        axis=1).astype(bf16)                               # (Dpad, 3*Hp)
    w_out_p = pad2(params["w_out"], Hp, Cp).astype(bf16)   # (Hp, Cp)
    b_out_p = pad2(params["b_out"], 1, Cp)                 # (1, Cp) f32

    # Explicit VMEM budget (double-buffered blocks + weights + scratch).
    blk_bytes = (2 * (Bb * T * Dpad * 2)                       # ctx (bf16)
                 + 2 * (Bb * L * Cp * 4 + Bb * L * Tp * 4)     # outputs
                 + (Hp * (3 * Hp + 128) + Dpad * 3 * Hp + Hp * Cp) * 2
                 + Cp * 4
                 + Bb * T * 3 * Hp * 4)                        # ctx_proj scratch
    vmem_limit = int(min(96 << 20, max(32 << 20, 2 * blk_bytes)))

    logits_p, attw_p = pl.pallas_call(
        _decoder_kernel,
        grid=(num_b,),
        in_specs=[
            pl.BlockSpec((Bb, T, Dpad), lambda i: (i, 0, 0)),
            pl.BlockSpec((Hp, 3 * Hp + 128), lambda i: (0, 0)),
            pl.BlockSpec((Dpad, 3 * Hp), lambda i: (0, 0)),
            pl.BlockSpec((Hp, Cp), lambda i: (0, 0)),
            pl.BlockSpec((1, Cp), lambda i: (0, 0)),
        ],
        out_specs=[
            pl.BlockSpec((Bb, L, Cp), lambda i: (i, 0, 0)),
            pl.BlockSpec((Bb, L, Tp), lambda i: (i, 0, 0)),
        ],
        out_shape=[
            jax.ShapeDtypeStruct((B, L, Cp), f32),
            jax.ShapeDtypeStruct((B, L, Tp), f32),
        ],
        scratch_shapes=[pltpu.VMEM((Bb, T, 3 * Hp), f32)],
        compiler_params=pltpu.CompilerParams(
            dimension_semantics=("parallel",),
            vmem_limit_bytes=vmem_limit),
    )(ctx.astype(bf16), w_hh_ext, w_ih_all, w_out_p, b_out_p)

    # Wrapper-side slicing of the lane padding (free layout plumbing).
    return logits_p[..., :Cn], attw_p[..., :T]


def category_branch_forward(x, params, output_len, stride=(2, 2)):
    ctx = conv_encoder(x, params["w_conv"], params["b_conv"], stride=stride)
    return decoder_loop(ctx, params, output_len)


# ---------------------------------------------------------------------------
# Deterministic parameter init + pure-JAX f32 reference for sanity checking
# ---------------------------------------------------------------------------
def init_params(key, n_frames, enc_filters, decoder_dim, n_classes,
                kernel_shape=(3, 3), stride=(2, 2)):
    KH, KW = kernel_shape
    Wo = (n_frames + 2 * ((KW - 1) // 2) - KW) // stride[1] + 1
    Din = enc_filters * Wo
    ks = jax.random.split(key, 8)
    s = 0.1
    return dict(
        w_conv=s * jax.random.normal(ks[0], (enc_filters, 1, KH, KW), jnp.float32),
        b_conv=s * jax.random.normal(ks[1], (enc_filters,), jnp.float32),
        w_ih=s * jax.random.normal(ks[2], (3, Din, decoder_dim), jnp.float32),
        w_hh=s * jax.random.normal(ks[3], (3, decoder_dim, decoder_dim), jnp.float32),
        w_kappa=s * jax.random.normal(ks[4], (1, decoder_dim), jnp.float32),
        w_beta=s * jax.random.normal(ks[5], (1, decoder_dim), jnp.float32),
        w_out=s * jax.random.normal(ks[6], (decoder_dim, n_classes), jnp.float32),
        b_out=s * jax.random.normal(ks[7], (1, n_classes), jnp.float32),
    )


def reference_forward(x, params, output_len, stride=(2, 2)):
    conv = lax.conv_general_dilated(
        x, params["w_conv"], window_strides=stride, padding=((1, 1), (1, 1)),
        dimension_numbers=("NCHW", "OIHW", "NCHW"),
    ) + params["b_conv"][None, :, None, None]
    B, F, Ho, Wo = conv.shape
    context = jnp.transpose(conv, (0, 2, 1, 3)).reshape(B, Ho, F * Wo)
    H = params["w_hh"].shape[-1]
    hidden = jnp.zeros((B, H), jnp.float32)
    kappa = jnp.zeros((B, 1), jnp.float32)
    pos = jnp.arange(Ho, dtype=jnp.float32)[None, :]
    logits_all, w_all = [], []
    for _ in range(output_len):
        kd = jnp.exp(jnp.sum(hidden * params["w_kappa"], -1, keepdims=True))
        beta = jnp.exp(jnp.sum(hidden * params["w_beta"], -1, keepdims=True))
        kappa = kappa + kd
        w = jnp.exp(-beta * (kappa - pos) ** 2)
        attended = jnp.einsum("bt,btd->bd", w, context)
        gi = [attended @ params["w_ih"][k] for k in range(3)]
        gh = [hidden @ params["w_hh"][k] for k in range(3)]
        r = jax.nn.sigmoid(gi[0] + gh[0])
        z = jax.nn.sigmoid(gi[1] + gh[1])
        n = jnp.tanh(gi[2] + r * gh[2])
        hidden = (1.0 - z) * n + z * hidden
        logits_all.append(hidden @ params["w_out"] + params["b_out"])
        w_all.append(w)
    return jnp.stack(logits_all, 1), jnp.stack(w_all, 1)


if __name__ == "__main__":
    # Small shapes consistent with the module:
    # input (B, 1, n_bins, n_frames); stride (2,2); T = n_bins/2; Din = F*n_frames/2
    B, n_bins, n_frames = 2, 16, 16
    enc_filters, decoder_dim, n_classes = 8, 32, 5
    output_len = 4

    key = jax.random.PRNGKey(0)
    k_x, k_p = jax.random.split(key)
    x = jax.random.normal(k_x, (B, 1, n_bins, n_frames), jnp.float32)
    params = init_params(k_p, n_frames, enc_filters, decoder_dim, n_classes)

    logits, att_weights = category_branch_forward(x, params, output_len)
    logits = jax.block_until_ready(logits)
    att_weights = jax.block_until_ready(att_weights)

    ref_logits, ref_weights = reference_forward(x, params, output_len)
    assert logits.shape == (B, output_len, n_classes)
    assert att_weights.shape == (B, output_len, n_bins // 2)
    err_l = float(jnp.max(jnp.abs(logits - ref_logits)))
    err_w = float(jnp.max(jnp.abs(att_weights - ref_weights)))
    # bf16 MXU operands (f32 accumulation) vs. the pure-f32 reference.
    assert err_l < 1e-2, f"logits max err {err_l}"
    assert err_w < 1e-2, f"attention weights max err {err_w}"

    print("KERNEL_OK")
</pallas_src>

<mosaic_0001>
module attributes {stable_mosaic.version = 11 : i64} {
  func.func @_encoder_kernel(%arg0: i32, %arg1: i32, %arg2: memref<3x16x18xbf16, #tpu.memory_space<vmem>>, %arg3: memref<3x18x128xbf16, #tpu.memory_space<vmem>>, %arg4: memref<1x128xf32, #tpu.memory_space<vmem>>, %arg5: memref<16x128xbf16, #tpu.memory_space<vmem>>) attributes {dimension_semantics = [#tpu.dimension_semantics<parallel>, #tpu.dimension_semantics<parallel>], iteration_bounds = array<i64: 1, 1>, scalar_prefetch = 0 : i64, scratch_operands = 0 : i64, tpu.core_type = #tpu.core_type<tc>, window_params = [{transform_indices = @transform_0, window_bounds = array<i64: 3, 16, 18>}, {transform_indices = @transform_1, window_bounds = array<i64: 3, 18, 128>}, {transform_indices = @transform_2, window_bounds = array<i64: 1, 128>}, {transform_indices = @transform_3, window_bounds = array<i64: 16, 128>}]} {
    %cst = arith.constant 0.000000e+00 : f32
    %0 = vector.broadcast %cst : f32 to vector<16x128xf32>
    %c0 = arith.constant 0 : index
    %c0_0 = arith.constant 0 : index
    %c0_1 = arith.constant 0 : index
    %1 = vector.load %arg2[%c0, %c0_0, %c0_1] : memref<3x16x18xbf16, #tpu.memory_space<vmem>>, vector<1x16x18xbf16>
    %2 = vector.shape_cast %1 : vector<1x16x18xbf16> to vector<16x18xbf16>
    %c0_2 = arith.constant 0 : index
    %c0_3 = arith.constant 0 : index
    %c0_4 = arith.constant 0 : index
    %3 = vector.load %arg3[%c0_2, %c0_3, %c0_4] : memref<3x18x128xbf16, #tpu.memory_space<vmem>>, vector<1x18x128xbf16>
    %4 = vector.shape_cast %3 : vector<1x18x128xbf16> to vector<18x128xbf16>
    %cst_5 = arith.constant dense<0.000000e+00> : vector<16x128xf32>
    %5 = tpu.matmul %2, %4, %cst_5 {dimension_numbers = #tpu.dot_dimension_numbers<[1], [0], [0], [1], [0, 0, 1, 1], [], []>} : vector<16x18xbf16>, vector<18x128xbf16>, vector<16x128xf32> -> vector<16x128xf32>
    %6 = arith.addf %0, %5 : vector<16x128xf32>
    %c1 = arith.constant 1 : index
    %c0_6 = arith.constant 0 : index
    %c0_7 = arith.constant 0 : index
    %7 = vector.load %arg2[%c1, %c0_6, %c0_7] : memref<3x16x18xbf16, #tpu.memory_space<vmem>>, vector<1x16x18xbf16>
    %8 = vector.shape_cast %7 : vector<1x16x18xbf16> to vector<16x18xbf16>
    %c1_8 = arith.constant 1 : index
    %c0_9 = arith.constant 0 : index
    %c0_10 = arith.constant 0 : index
    %9 = vector.load %arg3[%c1_8, %c0_9, %c0_10] : memref<3x18x128xbf16, #tpu.memory_space<vmem>>, vector<1x18x128xbf16>
    %10 = vector.shape_cast %9 : vector<1x18x128xbf16> to vector<18x128xbf16>
    %cst_11 = arith.constant dense<0.000000e+00> : vector<16x128xf32>
    %11 = tpu.matmul %8, %10, %cst_11 {dimension_numbers = #tpu.dot_dimension_numbers<[1], [0], [0], [1], [0, 0, 1, 1], [], []>} : vector<16x18xbf16>, vector<18x128xbf16>, vector<16x128xf32> -> vector<16x128xf32>
    %12 = arith.addf %6, %11 : vector<16x128xf32>
    %c2 = arith.constant 2 : index
    %c0_12 = arith.constant 0 : index
    %c0_13 = arith.constant 0 : index
    %13 = vector.load %arg2[%c2, %c0_12, %c0_13] : memref<3x16x18xbf16, #tpu.memory_space<vmem>>, vector<1x16x18xbf16>
    %14 = vector.shape_cast %13 : vector<1x16x18xbf16> to vector<16x18xbf16>
    %c2_14 = arith.constant 2 : index
    %c0_15 = arith.constant 0 : index
    %c0_16 = arith.constant 0 : index
    %15 = vector.load %arg3[%c2_14, %c0_15, %c0_16] : memref<3x18x128xbf16, #tpu.memory_space<vmem>>, vector<1x18x128xbf16>
    %16 = vector.shape_cast %15 : vector<1x18x128xbf16> to vector<18x128xbf16>
    %cst_17 = arith.constant dense<0.000000e+00> : vector<16x128xf32>
    %17 = tpu.matmul %14, %16, %cst_17 {dimension_numbers = #tpu.dot_dimension_numbers<[1], [0], [0], [1], [0, 0, 1, 1], [], []>} : vector<16x18xbf16>, vector<18x128xbf16>, vector<16x128xf32> -> vector<16x128xf32>
    %18 = arith.addf %12, %17 : vector<16x128xf32>
    %c0_18 = arith.constant 0 : index
    %c0_19 = arith.constant 0 : index
    %19 = vector.load %arg4[%c0_18, %c0_19] : memref<1x128xf32, #tpu.memory_space<vmem>>, vector<1x128xf32>
    %20 = vector.broadcast %19 : vector<1x128xf32> to vector<16x128xf32>
    %21 = arith.addf %18, %20 : vector<16x128xf32>
    %22 = arith.truncf %21 : vector<16x128xf32> to vector<16x128xbf16>
    %c0_20 = arith.constant 0 : index
    %c0_21 = arith.constant 0 : index
    %23 = vector.load %arg5[%c0_20, %c0_21] : memref<16x128xbf16, #tpu.memory_space<vmem>>, vector<16x128xbf16>
    tpu.vector_store %arg5[%c0_20, %c0_21], %22 {strides = array<i32>} : memref<16x128xbf16, #tpu.memory_space<vmem>>, vector<16x128xbf16>,
    return
  }
  func.func @transform_0(%arg0: i32, %arg1: i32) -> (i32, i32, i32) {
    %c0_i32 = arith.constant 0 : i32
    %c0_i32_0 = arith.constant 0 : i32
    %c0_i32_1 = arith.constant 0 : i32
    return %c0_i32, %arg0, %c0_i32_0 : i32, i32, i32
  }
  func.func @transform_1(%arg0: i32, %arg1: i32) -> (i32, i32, i32) {
    %c0_i32 = arith.constant 0 : i32
    %c0_i32_0 = arith.constant 0 : i32
    %c0_i32_1 = arith.constant 0 : i32
    return %c0_i32, %c0_i32_0, %arg1 : i32, i32, i32
  }
  func.func @transform_2(%arg0: i32, %arg1: i32) -> (i32, i32) {
    %c0_i32 = arith.constant 0 : i32
    %c0_i32_0 = arith.constant 0 : i32
    return %c0_i32, %arg1 : i32, i32
  }
  func.func @transform_3(%arg0: i32, %arg1: i32) -> (i32, i32) {
    %c0_i32 = arith.constant 0 : i32
    return %arg0, %arg1 : i32, i32
  }
}

</mosaic_0001>

<llo_original>
// kernel: tpu_custom_call.1
$region0: #{tpu_custom_call.1}
  #allocation0 [shape = 'u32[]', space=smem, size = 0x4, offset = 0x4, fixed_abs, tag = 'smem constant byte address 0x4 - core index']
  #allocation1 [shape = 'u32[144,128]{1,0:T(1,128)}', space=vmem, size = 0x12000, scoped, tag = 'internal scratch']
  %s0 = inlined_call_operand.hbm [shape: bf16[3,16,18], index: 0, kind: input, shape index: {}]
  %s1 = inlined_call_operand.hbm [shape: bf16[3,18,128], index: 1, kind: input, shape index: {}]
  %s2 = inlined_call_operand.vmem [shape: f32[1,128], index: 2, kind: input, shape index: {}]
  %s3 = inlined_call_operand.hbm [shape: bf16[16,128], index: 3, kind: output, shape index: {}]
  %s4 = sld [smem:[#allocation0]]
  $region30: #{tpu_custom_call.1} parent=0
    _
  %s6 = ssub.s32 1, %s4
  %s7 = scalar_select 0, %s6, %s4
  $region1: #{tpu_custom_call.1} parent=0
    #allocation2 [shape = 'u8[12288]{0}', space=vmem, size = 0x3000, scoped, tag = 'input window, operand 0, single buffered']
    #allocation3 [shape = 's32[1]{0}', space=sflag, size = 0x4, scoped, tag = 'scoped memory for tpu_custom_call.1']
    #allocation4 [shape = 's32[1]{0}', space=sflag, size = 0x4, scoped, tag = 'scoped memory for tpu_custom_call.1']
    #allocation5 [shape = 'u8[18432]{0}', space=vmem, size = 0x4800, scoped, tag = 'input window, operand 1, single buffered']
    #allocation6 [shape = 's32[1]{0}', space=sflag, size = 0x4, scoped, tag = 'scoped memory for tpu_custom_call.1']
    #allocation7 [shape = 'u8[4096]{0}', space=vmem, size = 0x1000, scoped, tag = 'output window, operand 0, single buffered']
    %8 = vsyncpa [#allocation3], 0
    %9 = vsyncpa [#allocation6], 0
    %10 = vsyncpa [#allocation4], 0
    // Predicated region
    $region2: #{tpu_custom_call.1} parent=1 // pred_check
      _
    $region3: #{tpu_custom_call.1} parent=1 // pred_check_branch
      %12 = sbr.rel (0) target = $region5
    $region4: #{tpu_custom_call.1} parent=1 // pred_region
      %s14 = ssub.s32 384, 384
      %15 = vsyncadd [#allocation3], %s14
      %s16 = sshll.u32 [#allocation2], 4
      %s17 = int_to_ptr.vmem [resolvable:$true] %s16
      %22 = dma.hbm_to_vmem [thread:$0]  %s0, 384, %s17, [#allocation3], 64, 64, 4
    $region5: #{tpu_custom_call.1} parent=1 // pred_fallthru
      _
    // Predicated region
    $region6: #{tpu_custom_call.1} parent=1 // pred_check
      _
    $region7: #{tpu_custom_call.1} parent=1 // pred_check_branch
      %24 = sbr.rel (0) target = $region9
    $region8: #{tpu_custom_call.1} parent=1 // pred_region
      %s26 = ssub.s32 576, 576
      %27 = vsyncadd [#allocation6], %s26
      %s28 = sshll.u32 [#allocation5], 4
      %s29 = int_to_ptr.vmem [resolvable:$true] %s28
      %34 = dma.hbm_to_vmem [thread:$0]  %s1, 576, %s29, [#allocation6], 64, 64, 4
    $region9: #{tpu_custom_call.1} parent=1 // pred_fallthru
      _
    // Predicated region
    $region10: #{tpu_custom_call.1} parent=1 // pred_check
      _
    $region11: #{tpu_custom_call.1} parent=1 // pred_check_branch
      %36 = sbr.rel (0) target = $region13
    $region12: #{tpu_custom_call.1} parent=1 // pred_region
      _
    $region13: #{tpu_custom_call.1} parent=1 // pred_fallthru
      _
    // Predicated region
    $region14: #{tpu_custom_call.1} parent=1 // pred_check
      _
    $region15: #{tpu_custom_call.1} parent=1 // pred_check_branch
      %38 = sbr.rel (0) target = $region17
    $region16: #{tpu_custom_call.1} parent=1 // pred_region
      %39 = dma.done [#allocation3], 384
    $region17: #{tpu_custom_call.1} parent=1 // pred_fallthru
      _
    // Predicated region
    $region18: #{tpu_custom_call.1} parent=1 // pred_check
      _
    $region19: #{tpu_custom_call.1} parent=1 // pred_check_branch
      %41 = sbr.rel (0) target = $region21
    $region20: #{tpu_custom_call.1} parent=1 // pred_region
      %42 = dma.done [#allocation6], 576
    $region21: #{tpu_custom_call.1} parent=1 // pred_fallthru
      _
    %v44 = vld [vmem:[#allocation2] sm:$0xf]
    %v45 = vld [vmem:[#allocation2 + $0x4] sm:$0xf]
    %v46 = vld [vmem:[#allocation5] sm:$0xf]
    %v47 = vld [vmem:[#allocation5 + $0x4] sm:$0xf]
    %v48 = vld [vmem:[#allocation5 + $0x8] sm:$0x1]
    %s49 = scalar_lea.vmem [#allocation2], 8
    %v50 = vld [vmem:[%s49] sm:$0xf]
    %v51 = vld [vmem:[%s49 + $0x4] sm:$0xf]
    %s52 = scalar_lea.vmem [#allocation5], 12
    %v53 = vld [vmem:[%s52] sm:$0xf]
    %v54 = vld [vmem:[%s52 + $0x4] sm:$0xf]
    %v55 = vld [vmem:[%s52 + $0x8] sm:$0x1]
    %v58 = vunpack.c.l.b16 %v50
    %v59 = vunpack.c.l.b16 %v51
    %v60 = vpack.c.b16 %v59, %v58
    %v64 = vunpack.c.l.b16 %v53
    %v65 = vunpack.c.l.b16 %v54
    %v66 = vunpack.c.l.b16 %v55
    %v67 = vpack.c.b16 %v65, %v64
    %v68 = vpack.c.b16 %v66, %v66
    %vm70 = vcmask 146432
    %v72 = vsel %vm70, %v60, 0
    %vm74 = vcmask 1040384
    %v76 = vsel %vm74, %v68, 0
    %78 = vmatprep.subr.bf16.mxu0 0
    %79 = vmatpush1.bf16.msra.mxu0 %v67
    %80 = vmatprep.subr.bf16.mxu0 0
    %81 = vmatpush1.bf16.msra.mxu0 %v76
    %82 = vmatprep.subr.bf16.mxu0 0
    %83 = vmatpush1.bf16.msra.mxu0 0
    %84 = vmatprep.subr.bf16.mxu0 0
    %85 = vmatpush1.bf16.msra.mxu0 0
    %86 = vmatprep.subr.bf16.mxu0 0
    %87 = vmatpush1.bf16.msra.mxu0 0
    %88 = vmatprep.subr.bf16.mxu0 0
    %89 = vmatpush1.bf16.msra.mxu0 0
    %90 = vmatprep.subr.bf16.mxu0 0
    %91 = vmatpush1.bf16.msra.mxu0 0
    %92 = vmatprep.subr.bf16.mxu0 0
    %93 = vmatpush1.bf16.msra.mxu0 0
    %94 = vmatprep.subr.bf16.mxu0 0
    %95 = vmatpush1.bf16.msra.mxu0 0
    %96 = vmatprep.subr.bf16.mxu0 0
    %97 = vmatpush1.bf16.msra.mxu0 0
    %98 = vmatprep.subr.bf16.mxu0 0
    %99 = vmatpush1.bf16.msra.mxu0 0
    %100 = vmatprep.subr.bf16.mxu0 0
    %101 = vmatpush1.bf16.msra.mxu0 0
    %102 = vmatprep.subr.bf16.mxu0 0
    %103 = vmatpush1.bf16.msra.mxu0 0
    %104 = vmatprep.subr.bf16.mxu0 0
    %105 = vmatpush1.bf16.msra.mxu0 0
    %106 = vmatprep.subr.bf16.mxu0 0
    %107 = vmatpush1.bf16.msra.mxu0 0
    %108 = vmatprep.subr.bf16.mxu0 0
    %109 = vmatpush1.bf16.msra.mxu0 0
    %110 = vmatprep.mubr.bf16.mxu0 0
    %111 = vmatmul.mubr.bf16.gmra.mrb[0].mxu0 %v72
    %v112 = vpop.f32.mrb[0].mxu0
    %v113 = vadd.f32 0.0, %v112
    %v114 = vpop.f32.mrb[0].mxu0
    %v115 = vpop.f32.mrb[0].mxu0
    %v116 = vadd.f32 0.0, %v115
    %v117 = vpop.f32.mrb[0].mxu0
    %118 = vdwg.mxu0
    %v121 = vunpack.c.l.b16 %v44
    %v122 = vunpack.c.l.b16 %v45
    %v123 = vpack.c.b16 %v122, %v121
    %v127 = vunpack.c.l.b16 %v46
    %v128 = vunpack.c.l.b16 %v47
    %v129 = vunpack.c.l.b16 %v48
    %v130 = vpack.c.b16 %v128, %v127
    %v131 = vpack.c.b16 %v129, %v129
    %v134 = vsel %vm70, %v123, 0
    %v137 = vsel %vm74, %v131, 0
    %139 = vmatprep.subr.bf16.mxu0 0
    %140 = vmatpush1.bf16.msra.mxu0 %v130
    %141 = vmatprep.subr.bf16.mxu0 0
    %142 = vmatpush1.bf16.msra.mxu0 %v137
    %143 = vmatprep.subr.bf16.mxu0 0
    %144 = vmatpush1.bf16.msra.mxu0 0
    %145 = vmatprep.subr.bf16.mxu0 0
    %146 = vmatpush1.bf16.msra.mxu0 0
    %147 = vmatprep.subr.bf16.mxu0 0
    %148 = vmatpush1.bf16.msra.mxu0 0
    %149 = vmatprep.subr.bf16.mxu0 0
    %150 = vmatpush1.bf16.msra.mxu0 0
    %151 = vmatprep.subr.bf16.mxu0 0
    %152 = vmatpush1.bf16.msra.mxu0 0
    %153 = vmatprep.subr.bf16.mxu0 0
    %154 = vmatpush1.bf16.msra.mxu0 0
    %155 = vmatprep.subr.bf16.mxu0 0
    %156 = vmatpush1.bf16.msra.mxu0 0
    %157 = vmatprep.subr.bf16.mxu0 0
    %158 = vmatpush1.bf16.msra.mxu0 0
    %159 = vmatprep.subr.bf16.mxu0 0
    %160 = vmatpush1.bf16.msra.mxu0 0
    %161 = vmatprep.subr.bf16.mxu0 0
    %162 = vmatpush1.bf16.msra.mxu0 0
    %163 = vmatprep.subr.bf16.mxu0 0
    %164 = vmatpush1.bf16.msra.mxu0 0
    %165 = vmatprep.subr.bf16.mxu0 0
    %166 = vmatpush1.bf16.msra.mxu0 0
    %167 = vmatprep.subr.bf16.mxu0 0
    %168 = vmatpush1.bf16.msra.mxu0 0
    %169 = vmatprep.subr.bf16.mxu0 0
    %170 = vmatpush1.bf16.msra.mxu0 0
    %171 = vmatprep.mubr.bf16.mxu0 0
    %172 = vmatmul.mubr.bf16.gmra.mrb[0].mxu0 %v134
    %v173 = vpop.f32.mrb[0].mxu0
    %v174 = vadd.f32 %v113, %v173
    %v175 = vpop.f32.mrb[0].mxu0
    %v176 = vpop.f32.mrb[0].mxu0
    %v177 = vadd.f32 %v116, %v176
    %v178 = vpop.f32.mrb[0].mxu0
    %179 = vdwg.mxu0
    %s180 = scalar_lea.vmem [#allocation2], 16
    %v181 = vld [vmem:[%s180] sm:$0xf]
    %v182 = vld [vmem:[%s180 + $0x4] sm:$0xf]
    %s183 = scalar_lea.vmem [#allocation5], 24
    %v184 = vld [vmem:[%s183] sm:$0xf]
    %v185 = vld [vmem:[%s183 + $0x4] sm:$0xf]
    %v186 = vld [vmem:[%s183 + $0x8] sm:$0x1]
    %v189 = vunpack.c.l.b16 %v181
    %v190 = vunpack.c.l.b16 %v182
    %v191 = vpack.c.b16 %v190, %v189
    %v195 = vunpack.c.l.b16 %v184
    %v196 = vunpack.c.l.b16 %v185
    %v197 = vunpack.c.l.b16 %v186
    %v198 = vpack.c.b16 %v196, %v195
    %v199 = vpack.c.b16 %v197, %v197
    %v202 = vsel %vm70, %v191, 0
    %v205 = vsel %vm74, %v199, 0
    %207 = vmatprep.subr.bf16.mxu0 0
    %208 = vmatpush1.bf16.msra.mxu0 %v198
    %209 = vmatprep.subr.bf16.mxu0 0
    %210 = vmatpush1.bf16.msra.mxu0 %v205
    %211 = vmatprep.subr.bf16.mxu0 0
    %212 = vmatpush1.bf16.msra.mxu0 0
    %213 = vmatprep.subr.bf16.mxu0 0
    %214 = vmatpush1.bf16.msra.mxu0 0
    %215 = vmatprep.subr.bf16.mxu0 0
    %216 = vmatpush1.bf16.msra.mxu0 0
    %217 = vmatprep.subr.bf16.mxu0 0
    %218 = vmatpush1.bf16.msra.mxu0 0
    %219 = vmatprep.subr.bf16.mxu0 0
    %220 = vmatpush1.bf16.msra.mxu0 0
    %221 = vmatprep.subr.bf16.mxu0 0
    %222 = vmatpush1.bf16.msra.mxu0 0
    %223 = vmatprep.subr.bf16.mxu0 0
    %224 = vmatpush1.bf16.msra.mxu0 0
    %225 = vmatprep.subr.bf16.mxu0 0
    %226 = vmatpush1.bf16.msra.mxu0 0
    %227 = vmatprep.subr.bf16.mxu0 0
    %228 = vmatpush1.bf16.msra.mxu0 0
    %229 = vmatprep.subr.bf16.mxu0 0
    %230 = vmatpush1.bf16.msra.mxu0 0
    %231 = vmatprep.subr.bf16.mxu0 0
    %232 = vmatpush1.bf16.msra.mxu0 0
    %233 = vmatprep.subr.bf16.mxu0 0
    %234 = vmatpush1.bf16.msra.mxu0 0
    %235 = vmatprep.subr.bf16.mxu0 0
    %236 = vmatpush1.bf16.msra.mxu0 0
    %237 = vmatprep.subr.bf16.mxu0 0
    %238 = vmatpush1.bf16.msra.mxu0 0
    %239 = vmatprep.mubr.bf16.mxu0 0
    %240 = vmatmul.mubr.bf16.gmra.mrb[0].mxu0 %v202
    %v241 = vpop.f32.mrb[0].mxu0
    %v242 = vadd.f32 0.0, %v241
    %v243 = vpop.f32.mrb[0].mxu0
    %v244 = vpop.f32.mrb[0].mxu0
    %v245 = vadd.f32 0.0, %v244
    %v246 = vpop.f32.mrb[0].mxu0
    %247 = vdwg.mxu0
    %v248 = vadd.f32 %v174, %v242
    %v249 = vadd.f32 %v177, %v245
    %v250 = vld [vmem:[%s2] sm:$0x1]
    %v252 = vlaneseq
    %v253 = vshrl.u32 %v252, 7
    %v254 = vsub.s32 0, %v253
    %v255 = vrot.slane %v250, %v254
    %v257 = vadd.f32 %v248, %v255
    %v258 = vadd.f32 %v249, %v255
    %v259 = vpack.c.bf16 %v258, %v257
    %v261 = vunpack.c.l.b16 %v259
    %v262 = vunpack.c.h.b16 %v259
    %v263 = vpack.c.b16 %v261, %v261
    %v264 = vpack.c.b16 %v262, %v262
    %267 = vst [vmem:[#allocation7] sm:$0xf] %v263
    %268 = vst [vmem:[#allocation7 + $0x4] sm:$0xf] %v264
    // Predicated region
    $region22: #{tpu_custom_call.1} parent=1 // pred_check
      _
    $region23: #{tpu_custom_call.1} parent=1 // pred_check_branch
      %270 = sbr.rel (0) target = $region25
    $region24: #{tpu_custom_call.1} parent=1 // pred_region
      %s272 = ssub.s32 128, 128
      %273 = vsyncadd [#allocation4], %s272
      %s274 = sshll.u32 [#allocation7], 4
      %s275 = int_to_ptr.vmem [resolvable:$true] %s274
      %280 = dma.vmem_to_hbm [thread:$0]  %s275, 128, %s3, [#allocation4], 64, 64, 4
    $region25: #{tpu_custom_call.1} parent=1 // pred_fallthru
      _
    // Predicated region
    $region26: #{tpu_custom_call.1} parent=1 // pred_check
      _
    $region27: #{tpu_custom_call.1} parent=1 // pred_check_branch
      %282 = sbr.rel (0) target = $region29
    $region28: #{tpu_custom_call.1} parent=1 // pred_region
      %283 = dma.done [#allocation4], 128
    $region29: #{tpu_custom_call.1} parent=1 // pred_fallthru
      _
    %284 = vsyncpa [#allocation3], 1
    %285 = vsyncpa [#allocation6], 1
    %286 = vsyncpa [#allocation4], 1

</llo_original>
